<compile_context>
chip_gen: v7x
topology: tpu7x:2x2x1
jax: 0.10.0
libtpu: 0.0.40
codegen_flags: <defaults>
</compile_context>

<pallas_src>
import jax
import jax.numpy as jnp
import numpy as np
from jax import lax
from jax.experimental import pallas as pl
from jax.experimental.pallas import tpu as pltpu

LANES = 128


def convrelu_kernel(c_ref, w_ref, b_ref, a_ref, o_ref):
    # One (tm, K) @ (K, Cpad) MXU pass, f32 accumulation, fused epilogue.
    y = jnp.dot(c_ref[...], w_ref[...], preferred_element_type=jnp.float32)
    y = y + b_ref[...]                        # conv bias (broadcast over rows)
    y = jnp.where(y > 0, y, a_ref[...] * y)   # per-channel PReLU
    o_ref[...] = y.astype(o_ref.dtype)


def conv_relu_pallas(x_ncdhw, weight_oikkk, bias_o, alpha_o, *, tm=512):
    N, Cin, D, H, W = x_ncdhw.shape
    Cout = weight_oikkk.shape[0]
    M = N * D * H * W
    K = 27 * Cin
    Cpad = max(LANES, ((Cout + LANES - 1) // LANES) * LANES)

    # NCDHW -> NDHWC, zero-pad spatial dims by 1 (kernel 3, padding 1).
    x = jnp.transpose(x_ncdhw, (0, 2, 3, 4, 1))
    xp = jnp.pad(x, ((0, 0), (1, 1), (1, 1), (1, 1), (0, 0)))

    # im2col: one (M, 27*Cin) operand, tap order (kd major, kw minor, Cin inner).
    # Read exactly once by the kernel (vs. 27x streaming in v1).
    # TODO(synk): forming the taps from a halo'd VMEM tile inside the kernel would
    # cut this ~27x HBM materialization down to ~1x of the input volume.
    cols = jnp.concatenate(
        [xp[:, kd:kd + D, kh:kh + H, kw:kw + W, :].reshape(M, Cin)
         for kd in range(3) for kh in range(3) for kw in range(3)],
        axis=1)  # (M, K)

    # PyTorch weight (Cout, Cin, kd, kh, kw) -> (K, Cout) in matching tap order;
    # zero-pad channels up to a lane-dense 128-wide output.
    w = jnp.transpose(weight_oikkk, (2, 3, 4, 1, 0)).reshape(K, Cout)
    w = jnp.pad(w, ((0, 0), (0, Cpad - Cout)))
    b = jnp.pad(bias_o, (0, Cpad - Cout)).reshape(1, Cpad)
    a = jnp.pad(alpha_o, (0, Cpad - Cout)).reshape(1, Cpad)

    # Tile the row axis; pad M so the grid divides evenly (8-aligned sublanes).
    tm = min(tm, ((M + 7) // 8) * 8)
    Mp = pl.cdiv(M, tm) * tm
    if Mp != M:
        cols = jnp.pad(cols, ((0, Mp - M), (0, 0)))

    out2d = pl.pallas_call(
        convrelu_kernel,
        out_shape=jax.ShapeDtypeStruct((Mp, Cpad), x_ncdhw.dtype),
        grid_spec=pltpu.PrefetchScalarGridSpec(
            num_scalar_prefetch=0,
            grid=(Mp // tm,),
            in_specs=[
                pl.BlockSpec((tm, K), lambda i: (i, 0)),      # im2col tile
                pl.BlockSpec((K, Cpad), lambda i: (0, 0)),    # fused weight
                pl.BlockSpec((1, Cpad), lambda i: (0, 0)),    # bias
                pl.BlockSpec((1, Cpad), lambda i: (0, 0)),    # PReLU alpha
            ],
            out_specs=pl.BlockSpec((tm, Cpad), lambda i: (i, 0)),
        ),
        compiler_params=pltpu.CompilerParams(
            dimension_semantics=("parallel",),
            vmem_limit_bytes=64 << 20,
        ),
    )(cols, w, b, a)

    # (Mp, Cpad) -> (M, Cout) -> (N, D, H, W, Cout) -> NCDHW (PyTorch convention).
    out = out2d[:M, :Cout].reshape(N, D, H, W, Cout)
    return jnp.transpose(out, (0, 4, 1, 2, 3))


def conv_relu_ref(x_ncdhw, weight_oikkk, bias_o, alpha_o):
    y = lax.conv_general_dilated(
        x_ncdhw, weight_oikkk, window_strides=(1, 1, 1),
        padding=[(1, 1), (1, 1), (1, 1)],
        dimension_numbers=('NCDHW', 'OIDHW', 'NCDHW'))
    y = y + bias_o.reshape(1, -1, 1, 1, 1)
    return jnp.where(y > 0, y, alpha_o.reshape(1, -1, 1, 1, 1) * y)


if __name__ == "__main__":
    key = jax.random.PRNGKey(0)
    kx, kw, kb, ka = jax.random.split(key, 4)

    N, Cin, Cout, D, H, W = 2, 4, 8, 8, 8, 8

    x = jax.random.normal(kx, (N, Cin, D, H, W), dtype=jnp.float32)
    # deterministic synthetic parameters (Conv3d(in_=4, out=8, 3, padding=1))
    weight = 0.1 * jax.random.normal(kw, (Cout, Cin, 3, 3, 3), dtype=jnp.float32)
    bias = 0.1 * jax.random.normal(kb, (Cout,), dtype=jnp.float32)
    # PReLU(out) per-channel alpha (PyTorch default is 0.25; perturbed here)
    alpha = 0.25 + 0.1 * jax.random.uniform(ka, (Cout,), dtype=jnp.float32)

    out = jax.block_until_ready(conv_relu_pallas(x, weight, bias, alpha))
    ref = jax.block_until_ready(conv_relu_ref(x, weight, bias, alpha))

    np.testing.assert_allclose(np.asarray(out), np.asarray(ref),
                               rtol=1e-4, atol=1e-4)
    print("KERNEL_OK")
</pallas_src>

<mosaic_0001>
module attributes {stable_mosaic.version = 11 : i64} {
  func.func @convrelu_kernel(%arg0: i32, %arg1: memref<512x108xf32, #tpu.memory_space<vmem>>, %arg2: memref<108x128xf32, #tpu.memory_space<vmem>>, %arg3: memref<1x128xf32, #tpu.memory_space<vmem>>, %arg4: memref<1x128xf32, #tpu.memory_space<vmem>>, %arg5: memref<512x128xf32, #tpu.memory_space<vmem>>) attributes {dimension_semantics = [#tpu.dimension_semantics<parallel>], iteration_bounds = array<i64: 2>, scalar_prefetch = 0 : i64, scratch_operands = 0 : i64, tpu.core_type = #tpu.core_type<tc>, window_params = [{transform_indices = @transform_0, window_bounds = array<i64: 512, 108>}, {pipeline_mode = #tpu.pipeline_mode<synchronous>, transform_indices = @transform_1, window_bounds = array<i64: 108, 128>}, {pipeline_mode = #tpu.pipeline_mode<synchronous>, transform_indices = @transform_2, window_bounds = array<i64: 1, 128>}, {pipeline_mode = #tpu.pipeline_mode<synchronous>, transform_indices = @transform_3, window_bounds = array<i64: 1, 128>}, {transform_indices = @transform_4, window_bounds = array<i64: 512, 128>}]} {
    %c0 = arith.constant 0 : index
    %c0_0 = arith.constant 0 : index
    %0 = vector.load %arg1[%c0, %c0_0] : memref<512x108xf32, #tpu.memory_space<vmem>>, vector<512x108xf32>
    %c0_1 = arith.constant 0 : index
    %c0_2 = arith.constant 0 : index
    %1 = vector.load %arg2[%c0_1, %c0_2] : memref<108x128xf32, #tpu.memory_space<vmem>>, vector<108x128xf32>
    %cst = arith.constant dense<0.000000e+00> : vector<512x128xf32>
    %2 = tpu.matmul %0, %1, %cst {dimension_numbers = #tpu.dot_dimension_numbers<[1], [0], [0], [1], [0, 0, 1, 1], [], []>} : vector<512x108xf32>, vector<108x128xf32>, vector<512x128xf32> -> vector<512x128xf32>
    %c0_3 = arith.constant 0 : index
    %c0_4 = arith.constant 0 : index
    %3 = vector.load %arg3[%c0_3, %c0_4] : memref<1x128xf32, #tpu.memory_space<vmem>>, vector<1x128xf32>
    %4 = vector.broadcast %3 : vector<1x128xf32> to vector<512x128xf32>
    %5 = arith.addf %2, %4 : vector<512x128xf32>
    %cst_5 = arith.constant 0.000000e+00 : f32
    %6 = vector.broadcast %cst_5 : f32 to vector<512x128xf32>
    %7 = arith.cmpf ogt, %5, %6 : vector<512x128xf32>
    %c0_6 = arith.constant 0 : index
    %c0_7 = arith.constant 0 : index
    %8 = vector.load %arg4[%c0_6, %c0_7] : memref<1x128xf32, #tpu.memory_space<vmem>>, vector<1x128xf32>
    %9 = vector.broadcast %8 : vector<1x128xf32> to vector<512x128xf32>
    %10 = arith.mulf %9, %5 : vector<512x128xf32>
    %11 = arith.select %7, %5, %10 : vector<512x128xi1>, vector<512x128xf32>
    %c0_8 = arith.constant 0 : index
    %c0_9 = arith.constant 0 : index
    %12 = vector.load %arg5[%c0_8, %c0_9] : memref<512x128xf32, #tpu.memory_space<vmem>>, vector<512x128xf32>
    tpu.vector_store %arg5[%c0_8, %c0_9], %11 {strides = array<i32>} : memref<512x128xf32, #tpu.memory_space<vmem>>, vector<512x128xf32>,
    return
  }
  func.func @transform_0(%arg0: i32) -> (i32, i32) {
    %c0_i32 = arith.constant 0 : i32
    %c0_i32_0 = arith.constant 0 : i32
    return %arg0, %c0_i32 : i32, i32
  }
  func.func @transform_1(%arg0: i32) -> (i32, i32) {
    %c0_i32 = arith.constant 0 : i32
    %c0_i32_0 = arith.constant 0 : i32
    %c0_i32_1 = arith.constant 0 : i32
    return %c0_i32, %c0_i32_0 : i32, i32
  }
  func.func @transform_2(%arg0: i32) -> (i32, i32) {
    %c0_i32 = arith.constant 0 : i32
    %c0_i32_0 = arith.constant 0 : i32
    %c0_i32_1 = arith.constant 0 : i32
    return %c0_i32, %c0_i32_0 : i32, i32
  }
  func.func @transform_3(%arg0: i32) -> (i32, i32) {
    %c0_i32 = arith.constant 0 : i32
    %c0_i32_0 = arith.constant 0 : i32
    %c0_i32_1 = arith.constant 0 : i32
    return %c0_i32, %c0_i32_0 : i32, i32
  }
  func.func @transform_4(%arg0: i32) -> (i32, i32) {
    %c0_i32 = arith.constant 0 : i32
    %c0_i32_0 = arith.constant 0 : i32
    return %arg0, %c0_i32 : i32, i32
  }
}

</mosaic_0001>

<llo_original>
// kernel: tpu_custom_call.1
$region0: #{tpu_custom_call.1}
  #allocation0 [shape = 'u32[]', space=smem, size = 0x4, offset = 0x4, fixed_abs, tag = 'smem constant byte address 0x4 - core index']
  #allocation1 [shape = 'u32[144,128]{1,0:T(1,128)}', space=vmem, size = 0x12000, scoped, tag = 'internal scratch']
  %s0 = inlined_call_operand.hbm [shape: f32[1024,108], index: 0, kind: input, shape index: {}]
  %s1 = inlined_call_operand.hbm [shape: f32[108,128], index: 1, kind: input, shape index: {}]
  %s2 = inlined_call_operand.hbm [shape: f32[1,128], index: 2, kind: input, shape index: {}]
  %s3 = inlined_call_operand.hbm [shape: f32[1,128], index: 3, kind: input, shape index: {}]
  %s4 = inlined_call_operand.hbm [shape: f32[1024,128], index: 4, kind: output, shape index: {}]
  %s5 = sld [smem:[#allocation0]]
  $region65: #{tpu_custom_call.1} parent=0
    _
  %s7 = ssub.s32 1, %s5
  %s8 = scalar_select 0, %s7, %s5
  $region1: #{tpu_custom_call.1} parent=0
    #allocation2 [shape = 'u8[524288]{0}', space=vmem, size = 0x80000, scoped, tag = 'input window, operand 0']
    #allocation3 [shape = 's32[2]{0}', space=sflag, size = 0x8, scoped, tag = 'scoped memory for tpu_custom_call.1']
    #allocation4 [shape = 's32[2]{0}', space=sflag, size = 0x8, scoped, tag = 'scoped memory for tpu_custom_call.1']
    #allocation5 [shape = 'u8[57344]{0}', space=vmem, size = 0xe000, scoped, tag = 'input window, operand 1, single buffered']
    #allocation6 [shape = 's32[1]{0}', space=sflag, size = 0x4, scoped, tag = 'scoped memory for tpu_custom_call.1']
    #allocation7 [shape = 'u8[512]{0}', space=vmem, size = 0x400, scoped, tag = 'input window, operand 2, single buffered']
    #allocation8 [shape = 'u8[512]{0}', space=vmem, size = 0x400, scoped, tag = 'input window, operand 3, single buffered']
    #allocation9 [shape = 's32[1]{0}', space=sflag, size = 0x4, scoped, tag = 'scoped memory for tpu_custom_call.1']
    #allocation10 [shape = 'u8[524288]{0}', space=vmem, size = 0x80000, scoped, tag = 'output window, operand 0']
    %9 = vsyncpa [#allocation3], 0
    %s10 = scalar_lea.sflag [#allocation3], 1
    %11 = vsyncpa %s10, 0
    %12 = vsyncpa [#allocation6], 0
    %13 = vsyncpa [#allocation9], 0
    %14 = vsyncpa [#allocation4], 0
    %s15 = scalar_lea.sflag [#allocation4], 1
    %16 = vsyncpa %s15, 0
    loop: start=0, step=1, limit=4
    $region2: #{tpu_custom_call.1} parent=1 // loop_pre_header
      _
    $region3: #{tpu_custom_call.1} parent=1 // loop_header
      %s18 = sphi 0, %s22
      %p19 = scmp.ge.s32.totalorder %s18, 4
      %s28 = sphi 0, %s30
      %s31 = sphi 0, %s28
      %s32 = sphi 0, %s31
      %s48 = sphi 0, %s32
      %s52 = sphi 0, %s52
      %s54 = sphi 0, %s52
      %s55 = sphi 0, %s54
      %s69 = sphi 0, %s55
      %s73 = sphi 0, %s73
      %s75 = sphi 0, %s73
      %s76 = sphi 0, %s75
      %s90 = sphi 0, %s76
      %s94 = sphi 0, %s94
      %s96 = sphi 0, %s94
      %s97 = sphi 0, %s96
      %s111 = sphi 0, %s97
      %s117 = sphi 0, %s119
      %s120 = sphi 0, %s117
      %s121 = sphi 0, %s120
      %s137 = sphi 0, %s121
    $region4: #{tpu_custom_call.1} parent=1 // loop_header_branch
      %21 = sbr.rel (%p19) target = $region8
    $region5: #{tpu_custom_call.1} parent=1 // loop_body
      %s23 = ssub.s32 %s18, 1
      %s24 = ssub.s32 %s18, 2
      %s25 = sadd.s32 %s18, 1
      %s26 = ssub.s32 %s18, %s25
      %p27 = scmp.eq.s32.totalorder %s26, 0
      %s29 = sadd.s32 %s28, 1
      %s30 = scalar_select %p27, %s28, %s29
      %p33 = pneg %p27
      %p34 = scmp.eq.s32.totalorder %s18, 1
      %p35 = por %p33, %p34
      %p36 = scmp.ne.s32.totalorder %s28, %s31
      %p37 = scmp.eq.s32.totalorder %s18, 0
      %p38 = por %p36, %p37
      %p39 = scmp.ne.s32.totalorder %s28, %s31
      %p40 = scmp.eq.s32.totalorder %s23, 1
      %p41 = por %p39, %p40
      %p42 = scmp.ne.s32.totalorder %s31, %s32
      %p43 = scmp.eq.s32.totalorder %s23, 0
      %p44 = por %p42, %p43
      %p45 = scmp.ne.s32.totalorder %s31, %s32
      %p46 = scmp.eq.s32.totalorder %s24, 1
      %p47 = por %p45, %p46
      %p49 = scmp.ne.s32.totalorder %s32, %s48
      %p50 = scmp.eq.s32.totalorder %s24, 0
      %p51 = por %p49, %p50
      %s53 = sadd.s32 %s52, 1
      %p56 = scmp.eq.s32.totalorder %s18, 1
      %p57 = scmp.ne.s32.totalorder %s52, %s54
      %p58 = scmp.eq.s32.totalorder %s18, 0
      %p59 = por %p57, %p58
      %p60 = scmp.ne.s32.totalorder %s52, %s54
      %p61 = scmp.eq.s32.totalorder %s23, 1
      %p62 = por %p60, %p61
      %p63 = scmp.ne.s32.totalorder %s54, %s55
      %p64 = scmp.eq.s32.totalorder %s23, 0
      %p65 = por %p63, %p64
      %p66 = scmp.ne.s32.totalorder %s54, %s55
      %p67 = scmp.eq.s32.totalorder %s24, 1
      %p68 = por %p66, %p67
      %p70 = scmp.ne.s32.totalorder %s55, %s69
      %p71 = scmp.eq.s32.totalorder %s24, 0
      %p72 = por %p70, %p71
      %s74 = sadd.s32 %s73, 1
      %p77 = scmp.eq.s32.totalorder %s18, 1
      %p78 = scmp.ne.s32.totalorder %s73, %s75
      %p79 = scmp.eq.s32.totalorder %s18, 0
      %p80 = por %p78, %p79
      %p81 = scmp.ne.s32.totalorder %s73, %s75
      %p82 = scmp.eq.s32.totalorder %s23, 1
      %p83 = por %p81, %p82
      %p84 = scmp.ne.s32.totalorder %s75, %s76
      %p85 = scmp.eq.s32.totalorder %s23, 0
      %p86 = por %p84, %p85
      %p87 = scmp.ne.s32.totalorder %s75, %s76
      %p88 = scmp.eq.s32.totalorder %s24, 1
      %p89 = por %p87, %p88
      %p91 = scmp.ne.s32.totalorder %s76, %s90
      %p92 = scmp.eq.s32.totalorder %s24, 0
      %p93 = por %p91, %p92
      %s95 = sadd.s32 %s94, 1
      %p98 = scmp.eq.s32.totalorder %s18, 1
      %p99 = scmp.ne.s32.totalorder %s94, %s96
      %p100 = scmp.eq.s32.totalorder %s18, 0
      %p101 = por %p99, %p100
      %p102 = scmp.ne.s32.totalorder %s94, %s96
      %p103 = scmp.eq.s32.totalorder %s23, 1
      %p104 = por %p102, %p103
      %p105 = scmp.ne.s32.totalorder %s96, %s97
      %p106 = scmp.eq.s32.totalorder %s23, 0
      %p107 = por %p105, %p106
      %p108 = scmp.ne.s32.totalorder %s96, %s97
      %p109 = scmp.eq.s32.totalorder %s24, 1
      %p110 = por %p108, %p109
      %p112 = scmp.ne.s32.totalorder %s97, %s111
      %p113 = scmp.eq.s32.totalorder %s24, 0
      %p114 = por %p112, %p113
      %s115 = ssub.s32 %s18, %s25
      %p116 = scmp.eq.s32.totalorder %s115, 0
      %s118 = sadd.s32 %s117, 1
      %s119 = scalar_select %p116, %s117, %s118
      %p122 = pneg %p116
      %p123 = scmp.eq.s32.totalorder %s18, 1
      %p124 = por %p122, %p123
      %p125 = scmp.ne.s32.totalorder %s117, %s120
      %p126 = scmp.eq.s32.totalorder %s18, 0
      %p127 = por %p125, %p126
      %p128 = scmp.ne.s32.totalorder %s117, %s120
      %p129 = scmp.eq.s32.totalorder %s23, 1
      %p130 = por %p128, %p129
      %p131 = scmp.ne.s32.totalorder %s120, %s121
      %p132 = scmp.eq.s32.totalorder %s23, 0
      %p133 = por %p131, %p132
      %p134 = scmp.ne.s32.totalorder %s120, %s121
      %p135 = scmp.eq.s32.totalorder %s24, 1
      %p136 = por %p134, %p135
      %p138 = scmp.ne.s32.totalorder %s121, %s137
      %p139 = scmp.eq.s32.totalorder %s24, 0
      %p140 = por %p138, %p139
      %p141 = scmp.le.s32.totalorder 1, %s18
      %p142 = scmp.lt.s32.totalorder %s18, 3
      %p143 = pnand %p141, %p142
      %p144 = pneg %p143
      // Predicated region
      $region9: #{tpu_custom_call.1} parent=5 // pred_check
        _
      $region10: #{tpu_custom_call.1} parent=5 // pred_check_branch
        %146 = sbr.rel (%p143) target = $region12
      $region11: #{tpu_custom_call.1} parent=5 // pred_region
        %s147 = ssub.s32 %s18, 1
        // Predicated region
        $region13: #{tpu_custom_call.1} parent=11 // pred_check
          %p148 = pneg %p65
        $region14: #{tpu_custom_call.1} parent=11 // pred_check_branch
          %150 = sbr.rel (%p148) target = $region16
        $region15: #{tpu_custom_call.1} parent=11 // pred_region
          %s152 = ssub.s32 1792, 1792
          %153 = vsyncadd [#allocation6], %s152
          %s154 = sshll.u32 [#allocation5], 4
          %s155 = int_to_ptr.vmem [resolvable:$true] %s154
          %160 = dma.hbm_to_vmem [thread:$0]  %s1, 1792, %s155, [#allocation6], 128, 128, 8
        $region16: #{tpu_custom_call.1} parent=11 // pred_fallthru
          _
        // Predicated region
        $region17: #{tpu_custom_call.1} parent=11 // pred_check
          %p161 = pneg %p86
        $region18: #{tpu_custom_call.1} parent=11 // pred_check_branch
          %163 = sbr.rel (%p161) target = $region20
        $region19: #{tpu_custom_call.1} parent=11 // pred_region
          %s165 = ssub.s32 16, 16
          %166 = vsyncadd [#allocation6], %s165
          %s168 = sshll.u32 [#allocation7], 4
          %s169 = int_to_ptr.vmem [resolvable:$true] %s168
          %171 = dma.hbm_to_vmem [thread:$0]  %s2, 16, %s169, [#allocation6]
        $region20: #{tpu_custom_call.1} parent=11 // pred_fallthru
          _
        // Predicated region
        $region21: #{tpu_custom_call.1} parent=11 // pred_check
          %p172 = pneg %p107
        $region22: #{tpu_custom_call.1} parent=11 // pred_check_branch
          %174 = sbr.rel (%p172) target = $region24
        $region23: #{tpu_custom_call.1} parent=11 // pred_region
          %s176 = ssub.s32 16, 16
          %177 = vsyncadd [#allocation9], %s176
          %s179 = sshll.u32 [#allocation8], 4
          %s180 = int_to_ptr.vmem [resolvable:$true] %s179
          %182 = dma.hbm_to_vmem [thread:$0]  %s3, 16, %s180, [#allocation9]
        $region24: #{tpu_custom_call.1} parent=11 // pred_fallthru
          _
      $region12: #{tpu_custom_call.1} parent=5 // pred_fallthru
        _
      %p183 = scmp.lt.s32.totalorder %s18, 2
      // Predicated region
      $region25: #{tpu_custom_call.1} parent=5 // pred_check
        %p184 = pneg %p183
      $region26: #{tpu_custom_call.1} parent=5 // pred_check_branch
        %186 = sbr.rel (%p184) target = $region28
      $region27: #{tpu_custom_call.1} parent=5 // pred_region
        // Predicated region
        $region29: #{tpu_custom_call.1} parent=27 // pred_check
          %p187 = pneg %p38
        $region30: #{tpu_custom_call.1} parent=27 // pred_check_branch
          %189 = sbr.rel (%p187) target = $region32
        $region31: #{tpu_custom_call.1} parent=27 // pred_region
          %s190 = sand.u32 %s28, 1
          %s191 = scalar_lea.sflag [#allocation3], %s190
          %s192 = sand.u32 %s28, 1
          %s193 = smul.addr %s192, 512
          %s194 = scalar_lea.vmem [#allocation2], %s193
          %s195 = smul.u32 64, %s18
          %s197 = ssub.s32 8192, 8192
          %198 = vsyncadd %s191, %s197
          %s199 = smul.addr %s195, 128
          %s200 = scalar_lea.hbm %s0, %s199
          %s201 = sshll.u32 %s194, 4
          %s202 = int_to_ptr.vmem [resolvable:$true] %s201
          %207 = dma.hbm_to_vmem [thread:$0]  %s200, 8192, %s202, %s191, 128, 128, 8
        $region32: #{tpu_custom_call.1} parent=27 // pred_fallthru
          _
      $region28: #{tpu_custom_call.1} parent=5 // pred_fallthru
        _
      %p208 = scmp.le.s32.totalorder 1, %s18
      %p209 = scmp.lt.s32.totalorder %s18, 3
      %p210 = pnand %p208, %p209
      %p211 = pneg %p210
      // Predicated region
      $region33: #{tpu_custom_call.1} parent=5 // pred_check
        _
      $region34: #{tpu_custom_call.1} parent=5 // pred_check_branch
        %213 = sbr.rel (%p210) target = $region36
      $region35: #{tpu_custom_call.1} parent=5 // pred_region
        %s214 = ssub.s32 %s18, 1
        %s215 = sand.u32 %s31, 1
        %s216 = scalar_lea.sflag [#allocation3], %s215
        %s217 = sand.u32 %s31, 1
        %s218 = smul.addr %s217, 512
        %s219 = scalar_lea.vmem [#allocation2], %s218
        // Predicated region
        $region37: #{tpu_custom_call.1} parent=35 // pred_check
          %p220 = pneg %p44
        $region38: #{tpu_custom_call.1} parent=35 // pred_check_branch
          %222 = sbr.rel (%p220) target = $region40
        $region39: #{tpu_custom_call.1} parent=35 // pred_region
          %223 = dma.done %s216, 8192
        $region40: #{tpu_custom_call.1} parent=35 // pred_fallthru
          _
        // Predicated region
        $region41: #{tpu_custom_call.1} parent=35 // pred_check
          %p224 = pneg %p65
        $region42: #{tpu_custom_call.1} parent=35 // pred_check_branch
          %226 = sbr.rel (%p224) target = $region44
        $region43: #{tpu_custom_call.1} parent=35 // pred_region
          %227 = dma.done [#allocation6], 1792
        $region44: #{tpu_custom_call.1} parent=35 // pred_fallthru
          _
        // Predicated region
        $region45: #{tpu_custom_call.1} parent=35 // pred_check
          %p228 = pneg %p86
        $region46: #{tpu_custom_call.1} parent=35 // pred_check_branch
          %230 = sbr.rel (%p228) target = $region48
        $region47: #{tpu_custom_call.1} parent=35 // pred_region
          %231 = dma.done [#allocation6], 16
        $region48: #{tpu_custom_call.1} parent=35 // pred_fallthru
          _
        // Predicated region
        $region49: #{tpu_custom_call.1} parent=35 // pred_check
          %p232 = pneg %p107
        $region50: #{tpu_custom_call.1} parent=35 // pred_check_branch
          %234 = sbr.rel (%p232) target = $region52
        $region51: #{tpu_custom_call.1} parent=35 // pred_region
          %235 = dma.done [#allocation9], 16
        $region52: #{tpu_custom_call.1} parent=35 // pred_fallthru
          _
        %s236 = sand.u32 %s31, 1
        %s237 = scalar_lea.sflag [#allocation3], %s236
        %s238 = sand.u32 %s31, 1
        %s239 = smul.addr %s238, 512
        %s240 = scalar_lea.vmem [#allocation2], %s239
        %p241 = pneg %p44
        %p242 = pneg %p41
        %p243 = pneg %p65
        %p244 = pneg %p62
        %p245 = pneg %p86
        %p246 = pneg %p83
        %p247 = pneg %p107
        %p248 = pneg %p104
        %p249 = pneg %p133
        %p250 = pneg %p130
        %s251 = sand.u32 %s120, 1
        %s252 = scalar_lea.sflag [#allocation4], %s251
        %s253 = sand.u32 %s120, 1
        %s254 = smul.addr %s253, 512
        %s255 = scalar_lea.vmem [#allocation10], %s254
        %s256 = smul.u32 64, %s23
        %s257 = smul.u32 64, %s23
        %v258 = vld [vmem:[%s219] sm:$0xff]
        %v259 = vld [vmem:[%s219 + $0x8] sm:$0xff]
        %v260 = vld [vmem:[%s219 + $0x10] sm:$0xff]
        %v261 = vld [vmem:[%s219 + $0x18] sm:$0xff]
        %v262 = vld [vmem:[%s219 + $0x20] sm:$0xff]
        %v263 = vld [vmem:[%s219 + $0x28] sm:$0xff]
        %v264 = vld [vmem:[%s219 + $0x30] sm:$0xff]
        %v265 = vld [vmem:[%s219 + $0x38] sm:$0xff]
        %v266 = vld [vmem:[%s219 + $0x40] sm:$0xff]
        %v267 = vld [vmem:[%s219 + $0x48] sm:$0xff]
        %v268 = vld [vmem:[%s219 + $0x50] sm:$0xff]
        %v269 = vld [vmem:[%s219 + $0x58] sm:$0xff]
        %v270 = vld [vmem:[%s219 + $0x60] sm:$0xff]
        %v271 = vld [vmem:[%s219 + $0x68] sm:$0xff]
        %v272 = vld [vmem:[%s219 + $0x70] sm:$0xff]
        %v273 = vld [vmem:[%s219 + $0x78] sm:$0xff]
        %v274 = vld [vmem:[%s219 + $0x80] sm:$0xff]
        %v275 = vld [vmem:[%s219 + $0x88] sm:$0xff]
        %v276 = vld [vmem:[%s219 + $0x90] sm:$0xff]
        %v277 = vld [vmem:[%s219 + $0x98] sm:$0xff]
        %v278 = vld [vmem:[%s219 + $0xa0] sm:$0xff]
        %v279 = vld [vmem:[%s219 + $0xa8] sm:$0xff]
        %v280 = vld [vmem:[%s219 + $0xb0] sm:$0xff]
        %v281 = vld [vmem:[%s219 + $0xb8] sm:$0xff]
        %v282 = vld [vmem:[%s219 + $0xc0] sm:$0xff]
        %v283 = vld [vmem:[%s219 + $0xc8] sm:$0xff]
        %v284 = vld [vmem:[%s219 + $0xd0] sm:$0xff]
        %v285 = vld [vmem:[%s219 + $0xd8] sm:$0xff]
        %v286 = vld [vmem:[%s219 + $0xe0] sm:$0xff]
        %v287 = vld [vmem:[%s219 + $0xe8] sm:$0xff]
        %v288 = vld [vmem:[%s219 + $0xf0] sm:$0xff]
        %v289 = vld [vmem:[%s219 + $0xf8] sm:$0xff]
        %v290 = vld [vmem:[%s219 + $0x100] sm:$0xff]
        %v291 = vld [vmem:[%s219 + $0x108] sm:$0xff]
        %v292 = vld [vmem:[%s219 + $0x110] sm:$0xff]
        %v293 = vld [vmem:[%s219 + $0x118] sm:$0xff]
        %v294 = vld [vmem:[%s219 + $0x120] sm:$0xff]
        %v295 = vld [vmem:[%s219 + $0x128] sm:$0xff]
        %v296 = vld [vmem:[%s219 + $0x130] sm:$0xff]
        %v297 = vld [vmem:[%s219 + $0x138] sm:$0xff]
        %v298 = vld [vmem:[%s219 + $0x140] sm:$0xff]
        %v299 = vld [vmem:[%s219 + $0x148] sm:$0xff]
        %v300 = vld [vmem:[%s219 + $0x150] sm:$0xff]
        %v301 = vld [vmem:[%s219 + $0x158] sm:$0xff]
        %v302 = vld [vmem:[%s219 + $0x160] sm:$0xff]
        %v303 = vld [vmem:[%s219 + $0x168] sm:$0xff]
        %v304 = vld [vmem:[%s219 + $0x170] sm:$0xff]
        %v305 = vld [vmem:[%s219 + $0x178] sm:$0xff]
        %v306 = vld [vmem:[%s219 + $0x180] sm:$0xff]
        %v307 = vld [vmem:[%s219 + $0x188] sm:$0xff]
        %v308 = vld [vmem:[%s219 + $0x190] sm:$0xff]
        %v309 = vld [vmem:[%s219 + $0x198] sm:$0xff]
        %v310 = vld [vmem:[%s219 + $0x1a0] sm:$0xff]
        %v311 = vld [vmem:[%s219 + $0x1a8] sm:$0xff]
        %v312 = vld [vmem:[%s219 + $0x1b0] sm:$0xff]
        %v313 = vld [vmem:[%s219 + $0x1b8] sm:$0xff]
        %v314 = vld [vmem:[%s219 + $0x1c0] sm:$0xff]
        %v315 = vld [vmem:[%s219 + $0x1c8] sm:$0xff]
        %v316 = vld [vmem:[%s219 + $0x1d0] sm:$0xff]
        %v317 = vld [vmem:[%s219 + $0x1d8] sm:$0xff]
        %v318 = vld [vmem:[%s219 + $0x1e0] sm:$0xff]
        %v319 = vld [vmem:[%s219 + $0x1e8] sm:$0xff]
        %v320 = vld [vmem:[%s219 + $0x1f0] sm:$0xff]
        %v321 = vld [vmem:[%s219 + $0x1f8] sm:$0xff]
        %v322 = vld [vmem:[#allocation5] sm:$0xff]
        %v323 = vld [vmem:[#allocation5 + $0x8] sm:$0xff]
        %v324 = vld [vmem:[#allocation5 + $0x10] sm:$0xff]
        %v325 = vld [vmem:[#allocation5 + $0x18] sm:$0xff]
        %v326 = vld [vmem:[#allocation5 + $0x20] sm:$0xff]
        %v327 = vld [vmem:[#allocation5 + $0x28] sm:$0xff]
        %v328 = vld [vmem:[#allocation5 + $0x30] sm:$0xff]
        %v329 = vld [vmem:[#allocation5 + $0x38] sm:$0xff]
        %v330 = vld [vmem:[#allocation5 + $0x40] sm:$0xff]
        %v331 = vld [vmem:[#allocation5 + $0x48] sm:$0xff]
        %v332 = vld [vmem:[#allocation5 + $0x50] sm:$0xff]
        %v333 = vld [vmem:[#allocation5 + $0x58] sm:$0xff]
        %v334 = vld [vmem:[#allocation5 + $0x60] sm:$0xff]
        %v335 = vld [vmem:[#allocation5 + $0x68] sm:$0xf]
        %v336 = vld [vmem:[#allocation7] sm:$0x1]
        %v338 = vlaneseq
        %v339 = vshrl.u32 %v338, 7
        %v340 = vsub.s32 0, %v339
        %v341 = vrot.slane %v336, %v340
        %vm343 = vcmask 883712
        %v345 = vsel %vm343, %v258, 0
        %v348 = vsel %vm343, %v259, 0
        %v351 = vsel %vm343, %v260, 0
        %v354 = vsel %vm343, %v261, 0
        %v357 = vsel %vm343, %v262, 0
        %v360 = vsel %vm343, %v263, 0
        %v363 = vsel %vm343, %v264, 0
        %v366 = vsel %vm343, %v265, 0
        %v369 = vsel %vm343, %v266, 0
        %v372 = vsel %vm343, %v267, 0
        %v375 = vsel %vm343, %v268, 0
        %v378 = vsel %vm343, %v269, 0
        %v381 = vsel %vm343, %v270, 0
        %v384 = vsel %vm343, %v271, 0
        %v387 = vsel %vm343, %v272, 0
        %v390 = vsel %vm343, %v273, 0
        %v393 = vsel %vm343, %v274, 0
        %v396 = vsel %vm343, %v275, 0
        %v399 = vsel %vm343, %v276, 0
        %v402 = vsel %vm343, %v277, 0
        %v405 = vsel %vm343, %v278, 0
        %v408 = vsel %vm343, %v279, 0
        %v411 = vsel %vm343, %v280, 0
        %v414 = vsel %vm343, %v281, 0
        %v417 = vsel %vm343, %v282, 0
        %v420 = vsel %vm343, %v283, 0
        %v423 = vsel %vm343, %v284, 0
        %v426 = vsel %vm343, %v285, 0
        %v429 = vsel %vm343, %v286, 0
        %v432 = vsel %vm343, %v287, 0
        %v435 = vsel %vm343, %v288, 0
        %v438 = vsel %vm343, %v289, 0
        %v441 = vsel %vm343, %v290, 0
        %v444 = vsel %vm343, %v291, 0
        %v447 = vsel %vm343, %v292, 0
        %v450 = vsel %vm343, %v293, 0
        %v453 = vsel %vm343, %v294, 0
        %v456 = vsel %vm343, %v295, 0
        %v459 = vsel %vm343, %v296, 0
        %v462 = vsel %vm343, %v297, 0
        %v465 = vsel %vm343, %v298, 0
        %v468 = vsel %vm343, %v299, 0
        %v471 = vsel %vm343, %v300, 0
        %v474 = vsel %vm343, %v301, 0
        %v477 = vsel %vm343, %v302, 0
        %v480 = vsel %vm343, %v303, 0
        %v483 = vsel %vm343, %v304, 0
        %v486 = vsel %vm343, %v305, 0
        %v489 = vsel %vm343, %v306, 0
        %v492 = vsel %vm343, %v307, 0
        %v495 = vsel %vm343, %v308, 0
        %v498 = vsel %vm343, %v309, 0
        %v501 = vsel %vm343, %v310, 0
        %v504 = vsel %vm343, %v311, 0
        %v507 = vsel %vm343, %v312, 0
        %v510 = vsel %vm343, %v313, 0
        %v513 = vsel %vm343, %v314, 0
        %v516 = vsel %vm343, %v315, 0
        %v519 = vsel %vm343, %v316, 0
        %v522 = vsel %vm343, %v317, 0
        %v525 = vsel %vm343, %v318, 0
        %v528 = vsel %vm343, %v319, 0
        %v531 = vsel %vm343, %v320, 0
        %v534 = vsel %vm343, %v321, 0
        %vm536 = vcmask 1043456
        %v538 = vsel %vm536, %v335, 0
        %540 = vmatprep.subr.mxu0 0.0
        %541 = vmatpush1.msra.mxu0 %v322
        %542 = vmatprep.subr.mxu0 0.0
        %543 = vmatpush1.msra.mxu0 %v323
        %544 = vmatprep.subr.mxu0 0.0
        %545 = vmatpush1.msra.mxu0 %v324
        %546 = vmatprep.subr.mxu0 0.0
        %547 = vmatpush1.msra.mxu0 %v325
        %548 = vmatprep.subr.mxu0 0.0
        %549 = vmatpush1.msra.mxu0 %v326
        %550 = vmatprep.subr.mxu0 0.0
        %551 = vmatpush1.msra.mxu0 %v327
        %552 = vmatprep.subr.mxu0 0.0
        %553 = vmatpush1.msra.mxu0 %v328
        %554 = vmatprep.subr.mxu0 0.0
        %555 = vmatpush1.msra.mxu0 %v329
        %556 = vmatprep.subr.mxu0 0.0
        %557 = vmatpush1.msra.mxu0 %v330
        %558 = vmatprep.subr.mxu0 0.0
        %559 = vmatpush1.msra.mxu0 %v331
        %560 = vmatprep.subr.mxu0 0.0
        %561 = vmatpush1.msra.mxu0 %v332
        %562 = vmatprep.subr.mxu0 0.0
        %563 = vmatpush1.msra.mxu0 %v333
        %564 = vmatprep.subr.mxu0 0.0
        %565 = vmatpush1.msra.mxu0 %v334
        %566 = vmatprep.subr.mxu0 0.0
        %567 = vmatpush1.msra.mxu0 %v538
        %568 = vmatprep.subr.mxu0 0.0
        %569 = vmatpush1.msra.mxu0 0.0
        %570 = vmatprep.subr.mxu0 0.0
        %571 = vmatpush1.msra.mxu0 0.0
        %572 = vmatprep.subr.mxu0 0.0
        %573 = vmatpush1.msra.mxu0 0.0
        %574 = vmatprep.subr.mxu0 0.0
        %575 = vmatpush1.msra.mxu0 0.0
        %576 = vmatprep.subr.mxu0 0.0
        %577 = vmatpush1.msra.mxu0 0.0
        %578 = vmatprep.subr.mxu0 0.0
        %579 = vmatpush1.msra.mxu0 0.0
        %580 = vmatprep.subr.mxu0 0.0
        %581 = vmatpush1.msra.mxu0 0.0
        %582 = vmatprep.subr.mxu0 0.0
        %583 = vmatpush1.msra.mxu0 0.0
        %584 = vmatprep.subr.mxu0 0.0
        %585 = vmatpush1.msra.mxu0 0.0
        %586 = vmatprep.subr.mxu0 0.0
        %587 = vmatpush1.msra.mxu0 0.0
        %588 = vmatprep.subr.mxu0 0.0
        %589 = vmatpush1.msra.mxu0 0.0
        %590 = vmatprep.subr.mxu0 0.0
        %591 = vmatpush1.msra.mxu0 0.0
        %592 = vmatprep.subr.mxu0 0.0
        %593 = vmatpush1.msra.mxu0 0.0
        %594 = vmatprep.subr.mxu0 0.0
        %595 = vmatpush1.msra.mxu0 0.0
        %596 = vmatprep.subr.mxu0 0.0
        %597 = vmatpush1.msra.mxu0 0.0
        %598 = vmatprep.subr.mxu0 0.0
        %599 = vmatpush1.msra.mxu0 0.0
        %600 = vmatprep.subr.mxu0 0.0
        %601 = vmatpush1.msra.mxu0 0.0
        %602 = vmatprep.subr.mxu0 0.0
        %603 = vmatpush1.msra.mxu0 0.0
        %604 = vmatprep.mubr.f32.mxu0 0.0
        %605 = vmatmul.mubr.f32.gmra.mrb[0].mxu0 %v345
        %v606 = vpop.f32.mrb[0].mxu0
        %v607 = vadd.f32 %v341, %v606
        %v608 = vpop.f32.mrb[0].mxu0
        %609 = vmatprep.mubr.f32.mxu0 0.0
        %610 = vmatmul.mubr.f32.gmra.mrb[0].mxu0 %v348
        %v611 = vpop.f32.mrb[0].mxu0
        %v612 = vadd.f32 %v341, %v611
        %v613 = vpop.f32.mrb[0].mxu0
        %614 = vmatprep.mubr.f32.mxu0 0.0
        %615 = vmatmul.mubr.f32.gmra.mrb[0].mxu0 %v351
        %v616 = vpop.f32.mrb[0].mxu0
        %v617 = vadd.f32 %v341, %v616
        %v618 = vpop.f32.mrb[0].mxu0
        %619 = vmatprep.mubr.f32.mxu0 0.0
        %620 = vmatmul.mubr.f32.gmra.mrb[0].mxu0 %v354
        %v621 = vpop.f32.mrb[0].mxu0
        %v622 = vadd.f32 %v341, %v621
        %v623 = vpop.f32.mrb[0].mxu0
        %624 = vmatprep.mubr.f32.mxu0 0.0
        %625 = vmatmul.mubr.f32.gmra.mrb[0].mxu0 %v357
        %v626 = vpop.f32.mrb[0].mxu0
        %v627 = vadd.f32 %v341, %v626
        %v628 = vpop.f32.mrb[0].mxu0
        %629 = vmatprep.mubr.f32.mxu0 0.0
        %630 = vmatmul.mubr.f32.gmra.mrb[0].mxu0 %v360
        %v631 = vpop.f32.mrb[0].mxu0
        %v632 = vadd.f32 %v341, %v631
        %v633 = vpop.f32.mrb[0].mxu0
        %634 = vmatprep.mubr.f32.mxu0 0.0
        %635 = vmatmul.mubr.f32.gmra.mrb[0].mxu0 %v363
        %v636 = vpop.f32.mrb[0].mxu0
        %v637 = vadd.f32 %v341, %v636
        %v638 = vpop.f32.mrb[0].mxu0
        %639 = vmatprep.mubr.f32.mxu0 0.0
        %640 = vmatmul.mubr.f32.gmra.mrb[0].mxu0 %v366
        %v641 = vpop.f32.mrb[0].mxu0
        %v642 = vadd.f32 %v341, %v641
        %v643 = vpop.f32.mrb[0].mxu0
        %644 = vmatprep.mubr.f32.mxu0 0.0
        %645 = vmatmul.mubr.f32.gmra.mrb[0].mxu0 %v369
        %v646 = vpop.f32.mrb[0].mxu0
        %v647 = vadd.f32 %v341, %v646
        %v648 = vpop.f32.mrb[0].mxu0
        %649 = vmatprep.mubr.f32.mxu0 0.0
        %650 = vmatmul.mubr.f32.gmra.mrb[0].mxu0 %v372
        %v651 = vpop.f32.mrb[0].mxu0
        %v652 = vadd.f32 %v341, %v651
        %v653 = vpop.f32.mrb[0].mxu0
        %654 = vmatprep.mubr.f32.mxu0 0.0
        %655 = vmatmul.mubr.f32.gmra.mrb[0].mxu0 %v375
        %v656 = vpop.f32.mrb[0].mxu0
        %v657 = vadd.f32 %v341, %v656
        %v658 = vpop.f32.mrb[0].mxu0
        %659 = vmatprep.mubr.f32.mxu0 0.0
        %660 = vmatmul.mubr.f32.gmra.mrb[0].mxu0 %v378
        %v661 = vpop.f32.mrb[0].mxu0
        %v662 = vadd.f32 %v341, %v661
        %v663 = vpop.f32.mrb[0].mxu0
        %664 = vmatprep.mubr.f32.mxu0 0.0
        %665 = vmatmul.mubr.f32.gmra.mrb[0].mxu0 %v381
        %v666 = vpop.f32.mrb[0].mxu0
        %v667 = vadd.f32 %v341, %v666
        %v668 = vpop.f32.mrb[0].mxu0
        %669 = vmatprep.mubr.f32.mxu0 0.0
        %670 = vmatmul.mubr.f32.gmra.mrb[0].mxu0 %v384
        %v671 = vpop.f32.mrb[0].mxu0
        %v672 = vadd.f32 %v341, %v671
        %v673 = vpop.f32.mrb[0].mxu0
        %674 = vmatprep.mubr.f32.mxu0 0.0
        %675 = vmatmul.mubr.f32.gmra.mrb[0].mxu0 %v387
        %v676 = vpop.f32.mrb[0].mxu0
        %v677 = vadd.f32 %v341, %v676
        %v678 = vpop.f32.mrb[0].mxu0
        %679 = vmatprep.mubr.f32.mxu0 0.0
        %680 = vmatmul.mubr.f32.gmra.mrb[0].mxu0 %v390
        %v681 = vpop.f32.mrb[0].mxu0
        %v682 = vadd.f32 %v341, %v681
        %v683 = vpop.f32.mrb[0].mxu0
        %684 = vmatprep.mubr.f32.mxu0 0.0
        %685 = vmatmul.mubr.f32.gmra.mrb[0].mxu0 %v393
        %v686 = vpop.f32.mrb[0].mxu0
        %v687 = vadd.f32 %v341, %v686
        %v688 = vpop.f32.mrb[0].mxu0
        %689 = vmatprep.mubr.f32.mxu0 0.0
        %690 = vmatmul.mubr.f32.gmra.mrb[0].mxu0 %v396
        %v691 = vpop.f32.mrb[0].mxu0
        %v692 = vadd.f32 %v341, %v691
        %v693 = vpop.f32.mrb[0].mxu0
        %694 = vmatprep.mubr.f32.mxu0 0.0
        %695 = vmatmul.mubr.f32.gmra.mrb[0].mxu0 %v399
        %v696 = vpop.f32.mrb[0].mxu0
        %v697 = vadd.f32 %v341, %v696
        %v698 = vpop.f32.mrb[0].mxu0
        %699 = vmatprep.mubr.f32.mxu0 0.0
        %700 = vmatmul.mubr.f32.gmra.mrb[0].mxu0 %v402
        %v701 = vpop.f32.mrb[0].mxu0
        %v702 = vadd.f32 %v341, %v701
        %v703 = vpop.f32.mrb[0].mxu0
        %704 = vmatprep.mubr.f32.mxu0 0.0
        %705 = vmatmul.mubr.f32.gmra.mrb[0].mxu0 %v405
        %v706 = vpop.f32.mrb[0].mxu0
        %v707 = vadd.f32 %v341, %v706
        %v708 = vpop.f32.mrb[0].mxu0
        %709 = vmatprep.mubr.f32.mxu0 0.0
        %710 = vmatmul.mubr.f32.gmra.mrb[0].mxu0 %v408
        %v711 = vpop.f32.mrb[0].mxu0
        %v712 = vadd.f32 %v341, %v711
        %v713 = vpop.f32.mrb[0].mxu0
        %714 = vmatprep.mubr.f32.mxu0 0.0
        %715 = vmatmul.mubr.f32.gmra.mrb[0].mxu0 %v411
        %v716 = vpop.f32.mrb[0].mxu0
        %v717 = vadd.f32 %v341, %v716
        %v718 = vpop.f32.mrb[0].mxu0
        %719 = vmatprep.mubr.f32.mxu0 0.0
        %720 = vmatmul.mubr.f32.gmra.mrb[0].mxu0 %v414
        %v721 = vpop.f32.mrb[0].mxu0
        %v722 = vadd.f32 %v341, %v721
        %v723 = vpop.f32.mrb[0].mxu0
        %724 = vmatprep.mubr.f32.mxu0 0.0
        %725 = vmatmul.mubr.f32.gmra.mrb[0].mxu0 %v417
        %v726 = vpop.f32.mrb[0].mxu0
        %v727 = vadd.f32 %v341, %v726
        %v728 = vpop.f32.mrb[0].mxu0
        %729 = vmatprep.mubr.f32.mxu0 0.0
        %730 = vmatmul.mubr.f32.gmra.mrb[0].mxu0 %v420
        %v731 = vpop.f32.mrb[0].mxu0
        %v732 = vadd.f32 %v341, %v731
        %v733 = vpop.f32.mrb[0].mxu0
        %734 = vmatprep.mubr.f32.mxu0 0.0
        %735 = vmatmul.mubr.f32.gmra.mrb[0].mxu0 %v423
        %v736 = vpop.f32.mrb[0].mxu0
        %v737 = vadd.f32 %v341, %v736
        %v738 = vpop.f32.mrb[0].mxu0
        %739 = vmatprep.mubr.f32.mxu0 0.0
        %740 = vmatmul.mubr.f32.gmra.mrb[0].mxu0 %v426
        %v741 = vpop.f32.mrb[0].mxu0
        %v742 = vadd.f32 %v341, %v741
        %v743 = vpop.f32.mrb[0].mxu0
        %744 = vmatprep.mubr.f32.mxu0 0.0
        %745 = vmatmul.mubr.f32.gmra.mrb[0].mxu0 %v429
        %v746 = vpop.f32.mrb[0].mxu0
        %v747 = vadd.f32 %v341, %v746
        %v748 = vpop.f32.mrb[0].mxu0
        %749 = vmatprep.mubr.f32.mxu0 0.0
        %750 = vmatmul.mubr.f32.gmra.mrb[0].mxu0 %v432
        %v751 = vpop.f32.mrb[0].mxu0
        %v752 = vadd.f32 %v341, %v751
        %v753 = vpop.f32.mrb[0].mxu0
        %754 = vmatprep.mubr.f32.mxu0 0.0
        %755 = vmatmul.mubr.f32.gmra.mrb[0].mxu0 %v435
        %v756 = vpop.f32.mrb[0].mxu0
        %v757 = vadd.f32 %v341, %v756
        %v758 = vpop.f32.mrb[0].mxu0
        %759 = vmatprep.mubr.f32.mxu0 0.0
        %760 = vmatmul.mubr.f32.gmra.mrb[0].mxu0 %v438
        %v761 = vpop.f32.mrb[0].mxu0
        %v762 = vadd.f32 %v341, %v761
        %v763 = vpop.f32.mrb[0].mxu0
        %764 = vmatprep.mubr.f32.mxu0 0.0
        %765 = vmatmul.mubr.f32.gmra.mrb[0].mxu0 %v441
        %v766 = vpop.f32.mrb[0].mxu0
        %v767 = vadd.f32 %v341, %v766
        %v768 = vpop.f32.mrb[0].mxu0
        %769 = vmatprep.mubr.f32.mxu0 0.0
        %770 = vmatmul.mubr.f32.gmra.mrb[0].mxu0 %v444
        %v771 = vpop.f32.mrb[0].mxu0
        %v772 = vadd.f32 %v341, %v771
        %v773 = vpop.f32.mrb[0].mxu0
        %774 = vmatprep.mubr.f32.mxu0 0.0
        %775 = vmatmul.mubr.f32.gmra.mrb[0].mxu0 %v447
        %v776 = vpop.f32.mrb[0].mxu0
        %v777 = vadd.f32 %v341, %v776
        %v778 = vpop.f32.mrb[0].mxu0
        %779 = vmatprep.mubr.f32.mxu0 0.0
        %780 = vmatmul.mubr.f32.gmra.mrb[0].mxu0 %v450
        %v781 = vpop.f32.mrb[0].mxu0
        %v782 = vadd.f32 %v341, %v781
        %v783 = vpop.f32.mrb[0].mxu0
        %784 = vmatprep.mubr.f32.mxu0 0.0
        %785 = vmatmul.mubr.f32.gmra.mrb[0].mxu0 %v453
        %v786 = vpop.f32.mrb[0].mxu0
        %v787 = vadd.f32 %v341, %v786
        %v788 = vpop.f32.mrb[0].mxu0
        %789 = vmatprep.mubr.f32.mxu0 0.0
        %790 = vmatmul.mubr.f32.gmra.mrb[0].mxu0 %v456
        %v791 = vpop.f32.mrb[0].mxu0
        %v792 = vadd.f32 %v341, %v791
        %v793 = vpop.f32.mrb[0].mxu0
        %794 = vmatprep.mubr.f32.mxu0 0.0
        %795 = vmatmul.mubr.f32.gmra.mrb[0].mxu0 %v459
        %v796 = vpop.f32.mrb[0].mxu0
        %v797 = vadd.f32 %v341, %v796
        %v798 = vpop.f32.mrb[0].mxu0
        %799 = vmatprep.mubr.f32.mxu0 0.0
        %800 = vmatmul.mubr.f32.gmra.mrb[0].mxu0 %v462
        %v801 = vpop.f32.mrb[0].mxu0
        %v802 = vadd.f32 %v341, %v801
        %v803 = vpop.f32.mrb[0].mxu0
        %804 = vmatprep.mubr.f32.mxu0 0.0
        %805 = vmatmul.mubr.f32.gmra.mrb[0].mxu0 %v465
        %v806 = vpop.f32.mrb[0].mxu0
        %v807 = vadd.f32 %v341, %v806
        %v808 = vpop.f32.mrb[0].mxu0
        %809 = vmatprep.mubr.f32.mxu0 0.0
        %810 = vmatmul.mubr.f32.gmra.mrb[0].mxu0 %v468
        %v811 = vpop.f32.mrb[0].mxu0
        %v812 = vadd.f32 %v341, %v811
        %v813 = vpop.f32.mrb[0].mxu0
        %814 = vmatprep.mubr.f32.mxu0 0.0
        %815 = vmatmul.mubr.f32.gmra.mrb[0].mxu0 %v471
        %v816 = vpop.f32.mrb[0].mxu0
        %v817 = vadd.f32 %v341, %v816
        %v818 = vpop.f32.mrb[0].mxu0
        %819 = vmatprep.mubr.f32.mxu0 0.0
        %820 = vmatmul.mubr.f32.gmra.mrb[0].mxu0 %v474
        %v821 = vpop.f32.mrb[0].mxu0
        %v822 = vadd.f32 %v341, %v821
        %v823 = vpop.f32.mrb[0].mxu0
        %824 = vmatprep.mubr.f32.mxu0 0.0
        %825 = vmatmul.mubr.f32.gmra.mrb[0].mxu0 %v477
        %v826 = vpop.f32.mrb[0].mxu0
        %v827 = vadd.f32 %v341, %v826
        %v828 = vpop.f32.mrb[0].mxu0
        %829 = vmatprep.mubr.f32.mxu0 0.0
        %830 = vmatmul.mubr.f32.gmra.mrb[0].mxu0 %v480
        %v831 = vpop.f32.mrb[0].mxu0
        %v832 = vadd.f32 %v341, %v831
        %v833 = vpop.f32.mrb[0].mxu0
        %834 = vmatprep.mubr.f32.mxu0 0.0
        %835 = vmatmul.mubr.f32.gmra.mrb[0].mxu0 %v483
        %v836 = vpop.f32.mrb[0].mxu0
        %v837 = vadd.f32 %v341, %v836
        %v838 = vpop.f32.mrb[0].mxu0
        %839 = vmatprep.mubr.f32.mxu0 0.0
        %840 = vmatmul.mubr.f32.gmra.mrb[0].mxu0 %v486
        %v841 = vpop.f32.mrb[0].mxu0
        %v842 = vadd.f32 %v341, %v841
        %v843 = vpop.f32.mrb[0].mxu0
        %844 = vmatprep.mubr.f32.mxu0 0.0
        %845 = vmatmul.mubr.f32.gmra.mrb[0].mxu0 %v489
        %v846 = vpop.f32.mrb[0].mxu0
        %v847 = vadd.f32 %v341, %v846
        %v848 = vpop.f32.mrb[0].mxu0
        %849 = vmatprep.mubr.f32.mxu0 0.0
        %850 = vmatmul.mubr.f32.gmra.mrb[0].mxu0 %v492
        %v851 = vpop.f32.mrb[0].mxu0
        %v852 = vadd.f32 %v341, %v851
        %v853 = vpop.f32.mrb[0].mxu0
        %854 = vmatprep.mubr.f32.mxu0 0.0
        %855 = vmatmul.mubr.f32.gmra.mrb[0].mxu0 %v495
        %v856 = vpop.f32.mrb[0].mxu0
        %v857 = vadd.f32 %v341, %v856
        %v858 = vpop.f32.mrb[0].mxu0
        %859 = vmatprep.mubr.f32.mxu0 0.0
        %860 = vmatmul.mubr.f32.gmra.mrb[0].mxu0 %v498
        %v861 = vpop.f32.mrb[0].mxu0
        %v862 = vadd.f32 %v341, %v861
        %v863 = vpop.f32.mrb[0].mxu0
        %864 = vmatprep.mubr.f32.mxu0 0.0
        %865 = vmatmul.mubr.f32.gmra.mrb[0].mxu0 %v501
        %v866 = vpop.f32.mrb[0].mxu0
        %v867 = vadd.f32 %v341, %v866
        %v868 = vpop.f32.mrb[0].mxu0
        %869 = vmatprep.mubr.f32.mxu0 0.0
        %870 = vmatmul.mubr.f32.gmra.mrb[0].mxu0 %v504
        %v871 = vpop.f32.mrb[0].mxu0
        %v872 = vadd.f32 %v341, %v871
        %v873 = vpop.f32.mrb[0].mxu0
        %874 = vmatprep.mubr.f32.mxu0 0.0
        %875 = vmatmul.mubr.f32.gmra.mrb[0].mxu0 %v507
        %v876 = vpop.f32.mrb[0].mxu0
        %v877 = vadd.f32 %v341, %v876
        %v878 = vpop.f32.mrb[0].mxu0
        %879 = vmatprep.mubr.f32.mxu0 0.0
        %880 = vmatmul.mubr.f32.gmra.mrb[0].mxu0 %v510
        %v881 = vpop.f32.mrb[0].mxu0
        %v882 = vadd.f32 %v341, %v881
        %v883 = vpop.f32.mrb[0].mxu0
        %884 = vmatprep.mubr.f32.mxu0 0.0
        %885 = vmatmul.mubr.f32.gmra.mrb[0].mxu0 %v513
        %v886 = vpop.f32.mrb[0].mxu0
        %v887 = vadd.f32 %v341, %v886
        %v888 = vpop.f32.mrb[0].mxu0
        %889 = vmatprep.mubr.f32.mxu0 0.0
        %890 = vmatmul.mubr.f32.gmra.mrb[0].mxu0 %v516
        %v891 = vpop.f32.mrb[0].mxu0
        %v892 = vadd.f32 %v341, %v891
        %v893 = vpop.f32.mrb[0].mxu0
        %894 = vmatprep.mubr.f32.mxu0 0.0
        %895 = vmatmul.mubr.f32.gmra.mrb[0].mxu0 %v519
        %v896 = vpop.f32.mrb[0].mxu0
        %v897 = vadd.f32 %v341, %v896
        %v898 = vpop.f32.mrb[0].mxu0
        %899 = vmatprep.mubr.f32.mxu0 0.0
        %900 = vmatmul.mubr.f32.gmra.mrb[0].mxu0 %v522
        %v901 = vpop.f32.mrb[0].mxu0
        %v902 = vadd.f32 %v341, %v901
        %v903 = vpop.f32.mrb[0].mxu0
        %904 = vmatprep.mubr.f32.mxu0 0.0
        %905 = vmatmul.mubr.f32.gmra.mrb[0].mxu0 %v525
        %v906 = vpop.f32.mrb[0].mxu0
        %v907 = vadd.f32 %v341, %v906
        %v908 = vpop.f32.mrb[0].mxu0
        %909 = vmatprep.mubr.f32.mxu0 0.0
        %910 = vmatmul.mubr.f32.gmra.mrb[0].mxu0 %v528
        %v911 = vpop.f32.mrb[0].mxu0
        %v912 = vadd.f32 %v341, %v911
        %v913 = vpop.f32.mrb[0].mxu0
        %914 = vmatprep.mubr.f32.mxu0 0.0
        %915 = vmatmul.mubr.f32.gmra.mrb[0].mxu0 %v531
        %v916 = vpop.f32.mrb[0].mxu0
        %v917 = vadd.f32 %v341, %v916
        %v918 = vpop.f32.mrb[0].mxu0
        %919 = vmatprep.mubr.f32.mxu0 0.0
        %920 = vmatmul.mubr.f32.gmra.mrb[0].mxu0 %v534
        %v921 = vpop.f32.mrb[0].mxu0
        %v922 = vadd.f32 %v341, %v921
        %v923 = vpop.f32.mrb[0].mxu0
        %924 = vdwg.mxu0
        %vm925 = vcmp.gt.f32.partialorder %v607, 0.0
        %vm926 = vcmp.gt.f32.partialorder %v612, 0.0
        %vm927 = vcmp.gt.f32.partialorder %v617, 0.0
        %vm928 = vcmp.gt.f32.partialorder %v622, 0.0
        %vm929 = vcmp.gt.f32.partialorder %v627, 0.0
        %vm930 = vcmp.gt.f32.partialorder %v632, 0.0
        %vm931 = vcmp.gt.f32.partialorder %v637, 0.0
        %vm932 = vcmp.gt.f32.partialorder %v642, 0.0
        %vm933 = vcmp.gt.f32.partialorder %v647, 0.0
        %vm934 = vcmp.gt.f32.partialorder %v652, 0.0
        %vm935 = vcmp.gt.f32.partialorder %v657, 0.0
        %vm936 = vcmp.gt.f32.partialorder %v662, 0.0
        %vm937 = vcmp.gt.f32.partialorder %v667, 0.0
        %vm938 = vcmp.gt.f32.partialorder %v672, 0.0
        %vm939 = vcmp.gt.f32.partialorder %v677, 0.0
        %vm940 = vcmp.gt.f32.partialorder %v682, 0.0
        %vm941 = vcmp.gt.f32.partialorder %v687, 0.0
        %vm942 = vcmp.gt.f32.partialorder %v692, 0.0
        %vm943 = vcmp.gt.f32.partialorder %v697, 0.0
        %vm944 = vcmp.gt.f32.partialorder %v702, 0.0
        %vm945 = vcmp.gt.f32.partialorder %v707, 0.0
        %vm946 = vcmp.gt.f32.partialorder %v712, 0.0
        %vm947 = vcmp.gt.f32.partialorder %v717, 0.0
        %vm948 = vcmp.gt.f32.partialorder %v722, 0.0
        %vm949 = vcmp.gt.f32.partialorder %v727, 0.0
        %vm950 = vcmp.gt.f32.partialorder %v732, 0.0
        %vm951 = vcmp.gt.f32.partialorder %v737, 0.0
        %vm952 = vcmp.gt.f32.partialorder %v742, 0.0
        %vm953 = vcmp.gt.f32.partialorder %v747, 0.0
        %vm954 = vcmp.gt.f32.partialorder %v752, 0.0
        %vm955 = vcmp.gt.f32.partialorder %v757, 0.0
        %vm956 = vcmp.gt.f32.partialorder %v762, 0.0
        %vm957 = vcmp.gt.f32.partialorder %v767, 0.0
        %vm958 = vcmp.gt.f32.partialorder %v772, 0.0
        %vm959 = vcmp.gt.f32.partialorder %v777, 0.0
        %vm960 = vcmp.gt.f32.partialorder %v782, 0.0
        %vm961 = vcmp.gt.f32.partialorder %v787, 0.0
        %vm962 = vcmp.gt.f32.partialorder %v792, 0.0
        %vm963 = vcmp.gt.f32.partialorder %v797, 0.0
        %vm964 = vcmp.gt.f32.partialorder %v802, 0.0
        %vm965 = vcmp.gt.f32.partialorder %v807, 0.0
        %vm966 = vcmp.gt.f32.partialorder %v812, 0.0
        %vm967 = vcmp.gt.f32.partialorder %v817, 0.0
        %vm968 = vcmp.gt.f32.partialorder %v822, 0.0
        %vm969 = vcmp.gt.f32.partialorder %v827, 0.0
        %vm970 = vcmp.gt.f32.partialorder %v832, 0.0
        %vm971 = vcmp.gt.f32.partialorder %v837, 0.0
        %vm972 = vcmp.gt.f32.partialorder %v842, 0.0
        %vm973 = vcmp.gt.f32.partialorder %v847, 0.0
        %vm974 = vcmp.gt.f32.partialorder %v852, 0.0
        %vm975 = vcmp.gt.f32.partialorder %v857, 0.0
        %vm976 = vcmp.gt.f32.partialorder %v862, 0.0
        %vm977 = vcmp.gt.f32.partialorder %v867, 0.0
        %vm978 = vcmp.gt.f32.partialorder %v872, 0.0
        %vm979 = vcmp.gt.f32.partialorder %v877, 0.0
        %vm980 = vcmp.gt.f32.partialorder %v882, 0.0
        %vm981 = vcmp.gt.f32.partialorder %v887, 0.0
        %vm982 = vcmp.gt.f32.partialorder %v892, 0.0
        %vm983 = vcmp.gt.f32.partialorder %v897, 0.0
        %vm984 = vcmp.gt.f32.partialorder %v902, 0.0
        %vm985 = vcmp.gt.f32.partialorder %v907, 0.0
        %vm986 = vcmp.gt.f32.partialorder %v912, 0.0
        %vm987 = vcmp.gt.f32.partialorder %v917, 0.0
        %vm988 = vcmp.gt.f32.partialorder %v922, 0.0
        %v989 = vld [vmem:[#allocation8] sm:$0x1]
        %v991 = vlaneseq
        %v992 = vshrl.u32 %v991, 7
        %v993 = vsub.s32 0, %v992
        %v994 = vrot.slane %v989, %v993
        %v996 = vmul.f32 %v994, %v607
        %v997 = vmul.f32 %v994, %v612
        %v998 = vmul.f32 %v994, %v617
        %v999 = vmul.f32 %v994, %v622
        %v1000 = vmul.f32 %v994, %v627
        %v1001 = vmul.f32 %v994, %v632
        %v1002 = vmul.f32 %v994, %v637
        %v1003 = vmul.f32 %v994, %v642
        %v1004 = vmul.f32 %v994, %v647
        %v1005 = vmul.f32 %v994, %v652
        %v1006 = vmul.f32 %v994, %v657
        %v1007 = vmul.f32 %v994, %v662
        %v1008 = vmul.f32 %v994, %v667
        %v1009 = vmul.f32 %v994, %v672
        %v1010 = vmul.f32 %v994, %v677
        %v1011 = vmul.f32 %v994, %v682
        %v1012 = vmul.f32 %v994, %v687
        %v1013 = vmul.f32 %v994, %v692
        %v1014 = vmul.f32 %v994, %v697
        %v1015 = vmul.f32 %v994, %v702
        %v1016 = vmul.f32 %v994, %v707
        %v1017 = vmul.f32 %v994, %v712
        %v1018 = vmul.f32 %v994, %v717
        %v1019 = vmul.f32 %v994, %v722
        %v1020 = vmul.f32 %v994, %v727
        %v1021 = vmul.f32 %v994, %v732
        %v1022 = vmul.f32 %v994, %v737
        %v1023 = vmul.f32 %v994, %v742
        %v1024 = vmul.f32 %v994, %v747
        %v1025 = vmul.f32 %v994, %v752
        %v1026 = vmul.f32 %v994, %v757
        %v1027 = vmul.f32 %v994, %v762
        %v1028 = vmul.f32 %v994, %v767
        %v1029 = vmul.f32 %v994, %v772
        %v1030 = vmul.f32 %v994, %v777
        %v1031 = vmul.f32 %v994, %v782
        %v1032 = vmul.f32 %v994, %v787
        %v1033 = vmul.f32 %v994, %v792
        %v1034 = vmul.f32 %v994, %v797
        %v1035 = vmul.f32 %v994, %v802
        %v1036 = vmul.f32 %v994, %v807
        %v1037 = vmul.f32 %v994, %v812
        %v1038 = vmul.f32 %v994, %v817
        %v1039 = vmul.f32 %v994, %v822
        %v1040 = vmul.f32 %v994, %v827
        %v1041 = vmul.f32 %v994, %v832
        %v1042 = vmul.f32 %v994, %v837
        %v1043 = vmul.f32 %v994, %v842
        %v1044 = vmul.f32 %v994, %v847
        %v1045 = vmul.f32 %v994, %v852
        %v1046 = vmul.f32 %v994, %v857
        %v1047 = vmul.f32 %v994, %v862
        %v1048 = vmul.f32 %v994, %v867
        %v1049 = vmul.f32 %v994, %v872
        %v1050 = vmul.f32 %v994, %v877
        %v1051 = vmul.f32 %v994, %v882
        %v1052 = vmul.f32 %v994, %v887
        %v1053 = vmul.f32 %v994, %v892
        %v1054 = vmul.f32 %v994, %v897
        %v1055 = vmul.f32 %v994, %v902
        %v1056 = vmul.f32 %v994, %v907
        %v1057 = vmul.f32 %v994, %v912
        %v1058 = vmul.f32 %v994, %v917
        %v1059 = vmul.f32 %v994, %v922
        %v1060 = vsel %vm925, %v607, %v996
        %v1061 = vsel %vm926, %v612, %v997
        %v1062 = vsel %vm927, %v617, %v998
        %v1063 = vsel %vm928, %v622, %v999
        %v1064 = vsel %vm929, %v627, %v1000
        %v1065 = vsel %vm930, %v632, %v1001
        %v1066 = vsel %vm931, %v637, %v1002
        %v1067 = vsel %vm932, %v642, %v1003
        %v1068 = vsel %vm933, %v647, %v1004
        %v1069 = vsel %vm934, %v652, %v1005
        %v1070 = vsel %vm935, %v657, %v1006
        %v1071 = vsel %vm936, %v662, %v1007
        %v1072 = vsel %vm937, %v667, %v1008
        %v1073 = vsel %vm938, %v672, %v1009
        %v1074 = vsel %vm939, %v677, %v1010
        %v1075 = vsel %vm940, %v682, %v1011
        %v1076 = vsel %vm941, %v687, %v1012
        %v1077 = vsel %vm942, %v692, %v1013
        %v1078 = vsel %vm943, %v697, %v1014
        %v1079 = vsel %vm944, %v702, %v1015
        %v1080 = vsel %vm945, %v707, %v1016
        %v1081 = vsel %vm946, %v712, %v1017
        %v1082 = vsel %vm947, %v717, %v1018
        %v1083 = vsel %vm948, %v722, %v1019
        %v1084 = vsel %vm949, %v727, %v1020
        %v1085 = vsel %vm950, %v732, %v1021
        %v1086 = vsel %vm951, %v737, %v1022
        %v1087 = vsel %vm952, %v742, %v1023
        %v1088 = vsel %vm953, %v747, %v1024
        %v1089 = vsel %vm954, %v752, %v1025
        %v1090 = vsel %vm955, %v757, %v1026
        %v1091 = vsel %vm956, %v762, %v1027
        %v1092 = vsel %vm957, %v767, %v1028
        %v1093 = vsel %vm958, %v772, %v1029
        %v1094 = vsel %vm959, %v777, %v1030
        %v1095 = vsel %vm960, %v782, %v1031
        %v1096 = vsel %vm961, %v787, %v1032
        %v1097 = vsel %vm962, %v792, %v1033
        %v1098 = vsel %vm963, %v797, %v1034
        %v1099 = vsel %vm964, %v802, %v1035
        %v1100 = vsel %vm965, %v807, %v1036
        %v1101 = vsel %vm966, %v812, %v1037
        %v1102 = vsel %vm967, %v817, %v1038
        %v1103 = vsel %vm968, %v822, %v1039
        %v1104 = vsel %vm969, %v827, %v1040
        %v1105 = vsel %vm970, %v832, %v1041
        %v1106 = vsel %vm971, %v837, %v1042
        %v1107 = vsel %vm972, %v842, %v1043
        %v1108 = vsel %vm973, %v847, %v1044
        %v1109 = vsel %vm974, %v852, %v1045
        %v1110 = vsel %vm975, %v857, %v1046
        %v1111 = vsel %vm976, %v862, %v1047
        %v1112 = vsel %vm977, %v867, %v1048
        %v1113 = vsel %vm978, %v872, %v1049
        %v1114 = vsel %vm979, %v877, %v1050
        %v1115 = vsel %vm980, %v882, %v1051
        %v1116 = vsel %vm981, %v887, %v1052
        %v1117 = vsel %vm982, %v892, %v1053
        %v1118 = vsel %vm983, %v897, %v1054
        %v1119 = vsel %vm984, %v902, %v1055
        %v1120 = vsel %vm985, %v907, %v1056
        %v1121 = vsel %vm986, %v912, %v1057
        %v1122 = vsel %vm987, %v917, %v1058
        %v1123 = vsel %vm988, %v922, %v1059
        %1124 = vst [vmem:[%s255] sm:$0xff] %v1060
        %1125 = vst [vmem:[%s255 + $0x8] sm:$0xff] %v1061
        %1126 = vst [vmem:[%s255 + $0x10] sm:$0xff] %v1062
        %1127 = vst [vmem:[%s255 + $0x18] sm:$0xff] %v1063
        %1128 = vst [vmem:[%s255 + $0x20] sm:$0xff] %v1064
        %1129 = vst [vmem:[%s255 + $0x28] sm:$0xff] %v1065
        %1130 = vst [vmem:[%s255 + $0x30] sm:$0xff] %v1066
        %1131 = vst [vmem:[%s255 + $0x38] sm:$0xff] %v1067
        %1132 = vst [vmem:[%s255 + $0x40] sm:$0xff] %v1068
        %1133 = vst [vmem:[%s255 + $0x48] sm:$0xff] %v1069
        %1134 = vst [vmem:[%s255 + $0x50] sm:$0xff] %v1070
        %1135 = vst [vmem:[%s255 + $0x58] sm:$0xff] %v1071
        %1136 = vst [vmem:[%s255 + $0x60] sm:$0xff] %v1072
        %1137 = vst [vmem:[%s255 + $0x68] sm:$0xff] %v1073
        %1138 = vst [vmem:[%s255 + $0x70] sm:$0xff] %v1074
        %1139 = vst [vmem:[%s255 + $0x78] sm:$0xff] %v1075
        %1140 = vst [vmem:[%s255 + $0x80] sm:$0xff] %v1076
        %1141 = vst [vmem:[%s255 + $0x88] sm:$0xff] %v1077
        %1142 = vst [vmem:[%s255 + $0x90] sm:$0xff] %v1078
        %1143 = vst [vmem:[%s255 + $0x98] sm:$0xff] %v1079
        %1144 = vst [vmem:[%s255 + $0xa0] sm:$0xff] %v1080
        %1145 = vst [vmem:[%s255 + $0xa8] sm:$0xff] %v1081
        %1146 = vst [vmem:[%s255 + $0xb0] sm:$0xff] %v1082
        %1147 = vst [vmem:[%s255 + $0xb8] sm:$0xff] %v1083
        %1148 = vst [vmem:[%s255 + $0xc0] sm:$0xff] %v1084
        %1149 = vst [vmem:[%s255 + $0xc8] sm:$0xff] %v1085
        %1150 = vst [vmem:[%s255 + $0xd0] sm:$0xff] %v1086
        %1151 = vst [vmem:[%s255 + $0xd8] sm:$0xff] %v1087
        %1152 = vst [vmem:[%s255 + $0xe0] sm:$0xff] %v1088
        %1153 = vst [vmem:[%s255 + $0xe8] sm:$0xff] %v1089
        %1154 = vst [vmem:[%s255 + $0xf0] sm:$0xff] %v1090
        %1155 = vst [vmem:[%s255 + $0xf8] sm:$0xff] %v1091
        %1156 = vst [vmem:[%s255 + $0x100] sm:$0xff] %v1092
        %1157 = vst [vmem:[%s255 + $0x108] sm:$0xff] %v1093
        %1158 = vst [vmem:[%s255 + $0x110] sm:$0xff] %v1094
        %1159 = vst [vmem:[%s255 + $0x118] sm:$0xff] %v1095
        %1160 = vst [vmem:[%s255 + $0x120] sm:$0xff] %v1096
        %1161 = vst [vmem:[%s255 + $0x128] sm:$0xff] %v1097
        %1162 = vst [vmem:[%s255 + $0x130] sm:$0xff] %v1098
        %1163 = vst [vmem:[%s255 + $0x138] sm:$0xff] %v1099
        %1164 = vst [vmem:[%s255 + $0x140] sm:$0xff] %v1100
        %1165 = vst [vmem:[%s255 + $0x148] sm:$0xff] %v1101
        %1166 = vst [vmem:[%s255 + $0x150] sm:$0xff] %v1102
        %1167 = vst [vmem:[%s255 + $0x158] sm:$0xff] %v1103
        %1168 = vst [vmem:[%s255 + $0x160] sm:$0xff] %v1104
        %1169 = vst [vmem:[%s255 + $0x168] sm:$0xff] %v1105
        %1170 = vst [vmem:[%s255 + $0x170] sm:$0xff] %v1106
        %1171 = vst [vmem:[%s255 + $0x178] sm:$0xff] %v1107
        %1172 = vst [vmem:[%s255 + $0x180] sm:$0xff] %v1108
        %1173 = vst [vmem:[%s255 + $0x188] sm:$0xff] %v1109
        %1174 = vst [vmem:[%s255 + $0x190] sm:$0xff] %v1110
        %1175 = vst [vmem:[%s255 + $0x198] sm:$0xff] %v1111
        %1176 = vst [vmem:[%s255 + $0x1a0] sm:$0xff] %v1112
        %1177 = vst [vmem:[%s255 + $0x1a8] sm:$0xff] %v1113
        %1178 = vst [vmem:[%s255 + $0x1b0] sm:$0xff] %v1114
        %1179 = vst [vmem:[%s255 + $0x1b8] sm:$0xff] %v1115
        %1180 = vst [vmem:[%s255 + $0x1c0] sm:$0xff] %v1116
        %1181 = vst [vmem:[%s255 + $0x1c8] sm:$0xff] %v1117
        %1182 = vst [vmem:[%s255 + $0x1d0] sm:$0xff] %v1118
        %1183 = vst [vmem:[%s255 + $0x1d8] sm:$0xff] %v1119
        %1184 = vst [vmem:[%s255 + $0x1e0] sm:$0xff] %v1120
        %1185 = vst [vmem:[%s255 + $0x1e8] sm:$0xff] %v1121
        %1186 = vst [vmem:[%s255 + $0x1f0] sm:$0xff] %v1122
        %1187 = vst [vmem:[%s255 + $0x1f8] sm:$0xff] %v1123
        %s1188 = sand.u32 %s120, 1
        %s1189 = scalar_lea.sflag [#allocation4], %s1188
        %s1190 = sand.u32 %s120, 1
        %s1191 = smul.addr %s1190, 512
        %s1192 = scalar_lea.vmem [#allocation10], %s1191
        // Predicated region
        $region53: #{tpu_custom_call.1} parent=35 // pred_check
          %p1193 = pneg %p130
        $region54: #{tpu_custom_call.1} parent=35 // pred_check_branch
          %1195 = sbr.rel (%p1193) target = $region56
        $region55: #{tpu_custom_call.1} parent=35 // pred_region
          %s1196 = smul.u32 64, %s23
          %s1198 = ssub.s32 8192, 8192
          %1199 = vsyncadd %s1189, %s1198
          %s1200 = smul.addr %s1196, 128
          %s1201 = scalar_lea.hbm %s4, %s1200
          %s1202 = sshll.u32 %s1192, 4
          %s1203 = int_to_ptr.vmem [resolvable:$true] %s1202
          %1208 = dma.vmem_to_hbm [thread:$0]  %s1203, 8192, %s1201, %s1189, 128, 128, 8
        $region56: #{tpu_custom_call.1} parent=35 // pred_fallthru
          _
      $region36: #{tpu_custom_call.1} parent=5 // pred_fallthru
        _
      %p1209 = scmp.le.s32.totalorder 2, %s18
      // Predicated region
      $region57: #{tpu_custom_call.1} parent=5 // pred_check
        %p1210 = pneg %p1209
      $region58: #{tpu_custom_call.1} parent=5 // pred_check_branch
        %1212 = sbr.rel (%p1210) target = $region60
      $region59: #{tpu_custom_call.1} parent=5 // pred_region
        %s1213 = ssub.s32 %s18, 2
        // Predicated region
        $region61: #{tpu_custom_call.1} parent=59 // pred_check
          %p1214 = pneg %p136
        $region62: #{tpu_custom_call.1} parent=59 // pred_check_branch
          %1216 = sbr.rel (%p1214) target = $region64
        $region63: #{tpu_custom_call.1} parent=59 // pred_region
          %s1217 = sand.u32 %s121, 1
          %s1218 = scalar_lea.sflag [#allocation4], %s1217
          %s1219 = sand.u32 %s121, 1
          %s1220 = smul.addr %s1219, 512
          %s1221 = scalar_lea.vmem [#allocation10], %s1220
          %1222 = dma.done %s1218, 8192
        $region64: #{tpu_custom_call.1} parent=59 // pred_fallthru
          _
      $region60: #{tpu_custom_call.1} parent=5 // pred_fallthru
        _
    $region6: #{tpu_custom_call.1} parent=1 // loop_footer
      %s22 = sadd.s32 1, %s18
    $region7: #{tpu_custom_call.1} parent=1 // loop_footer_branch
      %17 = sbr.rel target = $region3
    $region8: #{tpu_custom_call.1} parent=1 // loop_exit
      _
    %1223 = vsyncpa [#allocation3], 1
    %s1224 = scalar_lea.sflag [#allocation3], 1
    %1225 = vsyncpa %s1224, 1
    %1226 = vsyncpa [#allocation6], 1
    %1227 = vsyncpa [#allocation9], 1
    %1228 = vsyncpa [#allocation4], 1
    %s1229 = scalar_lea.sflag [#allocation4], 1
    %1230 = vsyncpa %s1229, 1

</llo_original>
